<compile_context>
chip_gen: v7x
topology: tpu7x:2x2x1
jax: 0.10.0
libtpu: 0.0.40
codegen_flags: <defaults>
</compile_context>

<pallas_src>
import functools

import jax
import jax.numpy as jnp
from jax.experimental import pallas as pl
from jax.experimental.pallas import tpu as pltpu


def _round_up(a: int, b: int) -> int:
    return (a + b - 1) // b * b


# --------------------------------------------------------------------------- #
# Kernel A: single-K-tile fast path (no reduction grid axis, no scratch).
# --------------------------------------------------------------------------- #
def _qkv_kernel_single_k(x_ref, w_ref, b_ref, o_ref):
    acc = jnp.dot(x_ref[...], w_ref[...], preferred_element_type=jnp.float32)
    o_ref[...] = (acc + b_ref[...]).astype(o_ref.dtype)


# --------------------------------------------------------------------------- #
# Kernel B: K-tiled reduction path. One (tm, tn) output tile, reduced over the
# K grid axis (last axis), f32 accumulator resident in VMEM.
# --------------------------------------------------------------------------- #
def _qkv_kernel_acc(x_ref, w_ref, b_ref, o_ref, acc_ref):
    @pl.when(pl.program_id(2) == 0)
    def _init():
        acc_ref[...] = jnp.zeros_like(acc_ref)

    acc_ref[...] += jnp.dot(
        x_ref[...], w_ref[...], preferred_element_type=jnp.float32
    )

    @pl.when(pl.program_id(2) == pl.num_programs(2) - 1)
    def _finalize():
        # Bias is stored in f32; add in f32, cast once at the final store.
        o_ref[...] = (acc_ref[...] + b_ref[...]).astype(o_ref.dtype)


# --------------------------------------------------------------------------- #
# One-time parameter prep (init-time, NOT per forward call):
#   concat Q/K/V weights on the output axis, transpose to (K, N),
#   pad K and N up to tile multiples, bias as padded f32 (1, Np).
# --------------------------------------------------------------------------- #
def fuse_qkv_params(wq, bq, wk, bk, wv, bv, *, tn=256, tk=512, compute_dtype=None):
    w_all = jnp.concatenate([wq, wk, wv], axis=0)   # (N, K) torch layout
    b_all = jnp.concatenate([bq, bk, bv], axis=0)   # (N,)
    if compute_dtype is not None:
        w_all = w_all.astype(compute_dtype)

    n_out, k_in = w_all.shape
    tn = min(tn, _round_up(n_out, 128))             # lane-dense (multiple of 128)
    tk = min(tk, _round_up(k_in, 128))
    n_pad = _round_up(n_out, tn)
    k_pad = _round_up(k_in, tk)

    w_t = jnp.pad(w_all.T, ((0, k_pad - k_in), (0, n_pad - n_out)))   # (Kp, Np)
    b2d = jnp.pad(b_all, (0, n_pad - n_out)).astype(jnp.float32).reshape(1, n_pad)

    return {
        "w_t": w_t,         # (Kp, Np), already transposed + padded
        "b": b2d,           # (1, Np), f32
        "n_out": n_out,
        "k_in": k_in,
        "tn": tn,
        "tk": tk,
    }


# --------------------------------------------------------------------------- #
# Forward: x (batch, seq, in_features) -> (batch, seq, out_features)
# --------------------------------------------------------------------------- #
@functools.partial(jax.jit, static_argnames=("n_out", "k_in", "tn", "tk", "tm_max"))
def qkv_forward(x, w_t, b, *, n_out, k_in, tn, tk, tm_max=256):
    batch, seq, in_features = x.shape
    assert in_features == k_in, (in_features, k_in)
    out_dtype = x.dtype
    compute_dtype = w_t.dtype

    m = batch * seq
    k_pad, n_pad = w_t.shape
    tm = min(tm_max, _round_up(m, 8))               # sublane-aligned M tile
    m_pad = _round_up(m, tm)

    x2d = x.reshape(m, in_features)
    if compute_dtype != x2d.dtype:
        x2d = x2d.astype(compute_dtype)
    if m_pad != m or k_pad != in_features:          # skip pad op when aligned
        x2d = jnp.pad(x2d, ((0, m_pad - m), (0, k_pad - in_features)))

    itemsize = lambda a: a.size * a.dtype.itemsize
    cost = pl.CostEstimate(
        flops=2 * m_pad * k_pad * n_pad,
        transcendentals=0,
        bytes_accessed=itemsize(x2d) + itemsize(w_t) + itemsize(b)
        + m_pad * n_pad * jnp.dtype(out_dtype).itemsize,
    )

    k_steps = k_pad // tk
    if k_steps == 1:
        # Fast path: whole K fits in one tile -> no scratch, 2-D grid.
        out2d = pl.pallas_call(
            _qkv_kernel_single_k,
            out_shape=jax.ShapeDtypeStruct((m_pad, n_pad), out_dtype),
            grid_spec=pltpu.PrefetchScalarGridSpec(
                num_scalar_prefetch=0,
                grid=(m_pad // tm, n_pad // tn),
                in_specs=[
                    pl.BlockSpec((tm, k_pad), lambda i, j: (i, 0)),   # x tile
                    pl.BlockSpec((k_pad, tn), lambda i, j: (0, j)),   # W^T tile
                    pl.BlockSpec((1, tn), lambda i, j: (0, j)),       # bias tile
                ],
                out_specs=pl.BlockSpec((tm, tn), lambda i, j: (i, j)),
            ),
            compiler_params=pltpu.CompilerParams(
                dimension_semantics=("parallel", "parallel"),
            ),
            cost_estimate=cost,
        )(x2d, w_t, b)
    else:
        # General path: reduce over K (last grid axis) with an f32 accumulator.
        out2d = pl.pallas_call(
            _qkv_kernel_acc,
            out_shape=jax.ShapeDtypeStruct((m_pad, n_pad), out_dtype),
            grid_spec=pltpu.PrefetchScalarGridSpec(
                num_scalar_prefetch=0,
                grid=(m_pad // tm, n_pad // tn, k_steps),
                in_specs=[
                    pl.BlockSpec((tm, tk), lambda i, j, k: (i, k)),   # x tile
                    pl.BlockSpec((tk, tn), lambda i, j, k: (k, j)),   # W^T tile
                    pl.BlockSpec((1, tn), lambda i, j, k: (0, j)),    # bias tile
                ],
                out_specs=pl.BlockSpec((tm, tn), lambda i, j, k: (i, j)),
                scratch_shapes=[pltpu.VMEM((tm, tn), jnp.float32)],   # f32 acc
            ),
            compiler_params=pltpu.CompilerParams(
                dimension_semantics=("parallel", "parallel", "arbitrary"),
            ),
            cost_estimate=cost,
        )(x2d, w_t, b)

    return out2d[:m, :n_out].reshape(batch, seq, n_out)


# --------------------------------------------------------------------------- #
# Init helper mimicking torch.nn.Linear default init (uniform +-1/sqrt(in)).
# --------------------------------------------------------------------------- #
def init_linear_params(key, out_dim, in_dim, dtype=jnp.float32):
    kw, kb = jax.random.split(key)
    bound = 1.0 / (in_dim ** 0.5)
    w = jax.random.uniform(kw, (out_dim, in_dim), dtype, minval=-bound, maxval=bound)
    b = jax.random.uniform(kb, (out_dim,), dtype, minval=-bound, maxval=bound)
    return w, b


if __name__ == "__main__":
    # Small shapes consistent with the module: in_features=32, out_features=48
    # (out_features // 3 = 16 each for Q/K/V), batch=2, seq=8.
    batch, seq = 2, 8
    in_features, out_features = 32, 48

    key = jax.random.PRNGKey(0)
    kx, kq, kk, kv = jax.random.split(key, 4)

    x = jax.random.normal(kx, (batch, seq, in_features), dtype=jnp.float32)
    wq, bq = init_linear_params(kq, out_features // 3, in_features)
    wk, bk = init_linear_params(kk, out_features // 3, in_features)
    wv, bv = init_linear_params(kv, out_features // 3, in_features)

    # Plain-JAX reference (same math as the PyTorch module).
    q_ref = x @ wq.T + bq
    k_ref = x @ wk.T + bk
    v_ref = x @ wv.T + bv
    ref = jnp.concatenate([q_ref, k_ref, v_ref], axis=-1)

    # --- f32 compute path (strict check) -----------------------------------
    params_f32 = fuse_qkv_params(wq, bq, wk, bk, wv, bv)
    out_f32 = qkv_forward(
        x, params_f32["w_t"], params_f32["b"],
        n_out=params_f32["n_out"], k_in=params_f32["k_in"],
        tn=params_f32["tn"], tk=params_f32["tk"],
    )
    out_f32 = jax.block_until_ready(out_f32)
    assert out_f32.shape == (batch, seq, out_features), out_f32.shape
    assert jnp.allclose(out_f32, ref, atol=1e-5, rtol=1e-5), "f32 mismatch vs reference"

    # --- bf16 compute path (MXU-native operands, f32 accumulation) ----------
    params_bf16 = fuse_qkv_params(wq, bq, wk, bk, wv, bv, compute_dtype=jnp.bfloat16)
    out_bf16 = qkv_forward(
        x, params_bf16["w_t"], params_bf16["b"],
        n_out=params_bf16["n_out"], k_in=params_bf16["k_in"],
        tn=params_bf16["tn"], tk=params_bf16["tk"],
    )
    out_bf16 = jax.block_until_ready(out_bf16)
    assert out_bf16.shape == (batch, seq, out_features), out_bf16.shape
    assert jnp.allclose(out_bf16, ref, atol=5e-2, rtol=5e-2), "bf16 mismatch vs reference"

    # --- larger, tile-exercising shape (hits the K-reduction path) ----------
    b2, s2, d2 = 4, 256, 1024
    k2 = jax.random.PRNGKey(1)
    kx2, kq2, kk2, kv2 = jax.random.split(k2, 4)
    x2 = jax.random.normal(kx2, (b2, s2, d2), dtype=jnp.float32)
    wq2, bq2 = init_linear_params(kq2, 384, d2)
    wk2, bk2 = init_linear_params(kk2, 384, d2)
    wv2, bv2 = init_linear_params(kv2, 384, d2)
    ref2 = jnp.concatenate([x2 @ wq2.T + bq2, x2 @ wk2.T + bk2, x2 @ wv2.T + bv2], axis=-1)
    p2 = fuse_qkv_params(wq2, bq2, wk2, bk2, wv2, bv2)
    out2 = qkv_forward(
        x2, p2["w_t"], p2["b"],
        n_out=p2["n_out"], k_in=p2["k_in"], tn=p2["tn"], tk=p2["tk"],
    )
    out2 = jax.block_until_ready(out2)
    assert out2.shape == (b2, s2, 3 * 384), out2.shape
    assert jnp.allclose(out2, ref2, atol=1e-3, rtol=1e-3), "large-shape mismatch vs reference"

    print("KERNEL_OK")
</pallas_src>

<mosaic_0001>
module attributes {stable_mosaic.version = 11 : i64} {
  func.func @_qkv_kernel_single_k(%arg0: i32, %arg1: i32, %arg2: memref<16x128xf32, #tpu.memory_space<vmem>>, %arg3: memref<128x128xf32, #tpu.memory_space<vmem>>, %arg4: memref<1x128xf32, #tpu.memory_space<vmem>>, %arg5: memref<16x128xf32, #tpu.memory_space<vmem>>) attributes {dimension_semantics = [#tpu.dimension_semantics<parallel>, #tpu.dimension_semantics<parallel>], iteration_bounds = array<i64: 1, 1>, scalar_prefetch = 0 : i64, scratch_operands = 0 : i64, tpu.core_type = #tpu.core_type<tc>, window_params = [{transform_indices = @transform_0, window_bounds = array<i64: 16, 128>}, {transform_indices = @transform_1, window_bounds = array<i64: 128, 128>}, {transform_indices = @transform_2, window_bounds = array<i64: 1, 128>}, {transform_indices = @transform_3, window_bounds = array<i64: 16, 128>}]} {
    %c0 = arith.constant 0 : index
    %c0_0 = arith.constant 0 : index
    %0 = vector.load %arg2[%c0, %c0_0] : memref<16x128xf32, #tpu.memory_space<vmem>>, vector<16x128xf32>
    %c0_1 = arith.constant 0 : index
    %c0_2 = arith.constant 0 : index
    %1 = vector.load %arg3[%c0_1, %c0_2] : memref<128x128xf32, #tpu.memory_space<vmem>>, vector<128x128xf32>
    %cst = arith.constant dense<0.000000e+00> : vector<16x128xf32>
    %2 = tpu.matmul %0, %1, %cst {dimension_numbers = #tpu.dot_dimension_numbers<[1], [0], [0], [1], [0, 0, 1, 1], [], []>} : vector<16x128xf32>, vector<128x128xf32>, vector<16x128xf32> -> vector<16x128xf32>
    %c0_3 = arith.constant 0 : index
    %c0_4 = arith.constant 0 : index
    %3 = vector.load %arg4[%c0_3, %c0_4] : memref<1x128xf32, #tpu.memory_space<vmem>>, vector<1x128xf32>
    %4 = vector.broadcast %3 : vector<1x128xf32> to vector<16x128xf32>
    %5 = arith.addf %2, %4 : vector<16x128xf32>
    %c0_5 = arith.constant 0 : index
    %c0_6 = arith.constant 0 : index
    %6 = vector.load %arg5[%c0_5, %c0_6] : memref<16x128xf32, #tpu.memory_space<vmem>>, vector<16x128xf32>
    tpu.vector_store %arg5[%c0_5, %c0_6], %5 {strides = array<i32>} : memref<16x128xf32, #tpu.memory_space<vmem>>, vector<16x128xf32>,
    return
  }
  func.func @transform_0(%arg0: i32, %arg1: i32) -> (i32, i32) {
    %c0_i32 = arith.constant 0 : i32
    %c0_i32_0 = arith.constant 0 : i32
    return %arg0, %c0_i32 : i32, i32
  }
  func.func @transform_1(%arg0: i32, %arg1: i32) -> (i32, i32) {
    %c0_i32 = arith.constant 0 : i32
    %c0_i32_0 = arith.constant 0 : i32
    return %c0_i32, %arg1 : i32, i32
  }
  func.func @transform_2(%arg0: i32, %arg1: i32) -> (i32, i32) {
    %c0_i32 = arith.constant 0 : i32
    %c0_i32_0 = arith.constant 0 : i32
    return %c0_i32, %arg1 : i32, i32
  }
  func.func @transform_3(%arg0: i32, %arg1: i32) -> (i32, i32) {
    %c0_i32 = arith.constant 0 : i32
    return %arg0, %arg1 : i32, i32
  }
}

</mosaic_0001>

<llo_original>
// kernel: qkv_forward.1
$region0: #{qkv_forward.1}
  #allocation0 [shape = 'u32[]', space=smem, size = 0x4, offset = 0x4, fixed_abs, tag = 'smem constant byte address 0x4 - core index']
  #allocation1 [shape = 'u32[144,128]{1,0:T(1,128)}', space=vmem, size = 0x12000, scoped, tag = 'internal scratch']
  %s0 = inlined_call_operand.vmem [shape: f32[16,128], index: 0, kind: input, shape index: {}]
  %s1 = inlined_call_operand.hbm [shape: f32[128,128], index: 1, kind: input, shape index: {}]
  %s2 = inlined_call_operand.vmem [shape: f32[1,128], index: 2, kind: input, shape index: {}]
  %s3 = inlined_call_operand.vmem [shape: f32[16,128], index: 3, kind: output, shape index: {}]
  %s4 = sld [smem:[#allocation0]]
  $region26: #{qkv_forward.1} parent=0
    _
  %s6 = ssub.s32 1, %s4
  %s7 = scalar_select 0, %s6, %s4
  $region1: #{qkv_forward.1} parent=0
    #allocation2 [shape = 'u8[65536]{0}', space=vmem, size = 0x10000, scoped, tag = 'input window, operand 1, single buffered']
    #allocation3 [shape = 's32[1]{0}', space=sflag, size = 0x4, scoped, tag = 'scoped memory for qkv_forward.1']
    %8 = vsyncpa [#allocation3], 0
    // Predicated region
    $region2: #{qkv_forward.1} parent=1 // pred_check
      _
    $region3: #{qkv_forward.1} parent=1 // pred_check_branch
      %10 = sbr.rel (0) target = $region5
    $region4: #{qkv_forward.1} parent=1 // pred_region
      _
    $region5: #{qkv_forward.1} parent=1 // pred_fallthru
      _
    // Predicated region
    $region6: #{qkv_forward.1} parent=1 // pred_check
      _
    $region7: #{qkv_forward.1} parent=1 // pred_check_branch
      %12 = sbr.rel (0) target = $region9
    $region8: #{qkv_forward.1} parent=1 // pred_region
      %s14 = ssub.s32 2048, 2048
      %15 = vsyncadd [#allocation3], %s14
      %s16 = sshll.u32 [#allocation2], 4
      %s17 = int_to_ptr.vmem [resolvable:$true] %s16
      %22 = dma.hbm_to_vmem [thread:$0]  %s1, 2048, %s17, [#allocation3], 128, 128, 8
    $region9: #{qkv_forward.1} parent=1 // pred_fallthru
      _
    // Predicated region
    $region10: #{qkv_forward.1} parent=1 // pred_check
      _
    $region11: #{qkv_forward.1} parent=1 // pred_check_branch
      %24 = sbr.rel (0) target = $region13
    $region12: #{qkv_forward.1} parent=1 // pred_region
      _
    $region13: #{qkv_forward.1} parent=1 // pred_fallthru
      _
    // Predicated region
    $region14: #{qkv_forward.1} parent=1 // pred_check
      _
    $region15: #{qkv_forward.1} parent=1 // pred_check_branch
      %26 = sbr.rel (0) target = $region17
    $region16: #{qkv_forward.1} parent=1 // pred_region
      %27 = dma.done [#allocation3], 2048
    $region17: #{qkv_forward.1} parent=1 // pred_fallthru
      _
    %v28 = vld [vmem:[%s0] sm:$0xff]
    %v29 = vld [vmem:[%s0 + $0x8] sm:$0xff]
    %v30 = vld [vmem:[#allocation2] sm:$0xff]
    %v31 = vld [vmem:[#allocation2 + $0x8] sm:$0xff]
    %v32 = vld [vmem:[#allocation2 + $0x10] sm:$0xff]
    %v33 = vld [vmem:[#allocation2 + $0x18] sm:$0xff]
    %v34 = vld [vmem:[#allocation2 + $0x20] sm:$0xff]
    %v35 = vld [vmem:[#allocation2 + $0x28] sm:$0xff]
    %v36 = vld [vmem:[#allocation2 + $0x30] sm:$0xff]
    %v37 = vld [vmem:[#allocation2 + $0x38] sm:$0xff]
    %v38 = vld [vmem:[#allocation2 + $0x40] sm:$0xff]
    %v39 = vld [vmem:[#allocation2 + $0x48] sm:$0xff]
    %v40 = vld [vmem:[#allocation2 + $0x50] sm:$0xff]
    %v41 = vld [vmem:[#allocation2 + $0x58] sm:$0xff]
    %v42 = vld [vmem:[#allocation2 + $0x60] sm:$0xff]
    %v43 = vld [vmem:[#allocation2 + $0x68] sm:$0xff]
    %v44 = vld [vmem:[#allocation2 + $0x70] sm:$0xff]
    %v45 = vld [vmem:[#allocation2 + $0x78] sm:$0xff]
    %v46 = vld [vmem:[%s2] sm:$0x1]
    %v48 = vlaneseq
    %v49 = vshrl.u32 %v48, 7
    %v50 = vsub.s32 0, %v49
    %v51 = vrot.slane %v46, %v50
    %53 = vmatprep.subr.mxu0 0.0
    %54 = vmatpush1.msra.mxu0 %v30
    %55 = vmatprep.subr.mxu0 0.0
    %56 = vmatpush1.msra.mxu0 %v31
    %57 = vmatprep.subr.mxu0 0.0
    %58 = vmatpush1.msra.mxu0 %v32
    %59 = vmatprep.subr.mxu0 0.0
    %60 = vmatpush1.msra.mxu0 %v33
    %61 = vmatprep.subr.mxu0 0.0
    %62 = vmatpush1.msra.mxu0 %v34
    %63 = vmatprep.subr.mxu0 0.0
    %64 = vmatpush1.msra.mxu0 %v35
    %65 = vmatprep.subr.mxu0 0.0
    %66 = vmatpush1.msra.mxu0 %v36
    %67 = vmatprep.subr.mxu0 0.0
    %68 = vmatpush1.msra.mxu0 %v37
    %69 = vmatprep.subr.mxu0 0.0
    %70 = vmatpush1.msra.mxu0 %v38
    %71 = vmatprep.subr.mxu0 0.0
    %72 = vmatpush1.msra.mxu0 %v39
    %73 = vmatprep.subr.mxu0 0.0
    %74 = vmatpush1.msra.mxu0 %v40
    %75 = vmatprep.subr.mxu0 0.0
    %76 = vmatpush1.msra.mxu0 %v41
    %77 = vmatprep.subr.mxu0 0.0
    %78 = vmatpush1.msra.mxu0 %v42
    %79 = vmatprep.subr.mxu0 0.0
    %80 = vmatpush1.msra.mxu0 %v43
    %81 = vmatprep.subr.mxu0 0.0
    %82 = vmatpush1.msra.mxu0 %v44
    %83 = vmatprep.subr.mxu0 0.0
    %84 = vmatpush1.msra.mxu0 %v45
    %85 = vmatprep.subr.mxu0 0.0
    %86 = vmatpush1.msra.mxu0 0.0
    %87 = vmatprep.subr.mxu0 0.0
    %88 = vmatpush1.msra.mxu0 0.0
    %89 = vmatprep.subr.mxu0 0.0
    %90 = vmatpush1.msra.mxu0 0.0
    %91 = vmatprep.subr.mxu0 0.0
    %92 = vmatpush1.msra.mxu0 0.0
    %93 = vmatprep.subr.mxu0 0.0
    %94 = vmatpush1.msra.mxu0 0.0
    %95 = vmatprep.subr.mxu0 0.0
    %96 = vmatpush1.msra.mxu0 0.0
    %97 = vmatprep.subr.mxu0 0.0
    %98 = vmatpush1.msra.mxu0 0.0
    %99 = vmatprep.subr.mxu0 0.0
    %100 = vmatpush1.msra.mxu0 0.0
    %101 = vmatprep.subr.mxu0 0.0
    %102 = vmatpush1.msra.mxu0 0.0
    %103 = vmatprep.subr.mxu0 0.0
    %104 = vmatpush1.msra.mxu0 0.0
    %105 = vmatprep.subr.mxu0 0.0
    %106 = vmatpush1.msra.mxu0 0.0
    %107 = vmatprep.subr.mxu0 0.0
    %108 = vmatpush1.msra.mxu0 0.0
    %109 = vmatprep.subr.mxu0 0.0
    %110 = vmatpush1.msra.mxu0 0.0
    %111 = vmatprep.subr.mxu0 0.0
    %112 = vmatpush1.msra.mxu0 0.0
    %113 = vmatprep.subr.mxu0 0.0
    %114 = vmatpush1.msra.mxu0 0.0
    %115 = vmatprep.subr.mxu0 0.0
    %116 = vmatpush1.msra.mxu0 0.0
    %117 = vmatprep.mubr.f32.mxu0 0.0
    %118 = vmatmul.mubr.f32.gmra.mrb[0].mxu0 %v28
    %v119 = vpop.f32.mrb[0].mxu0
    %v120 = vadd.f32 %v51, %v119
    %v121 = vpop.f32.mrb[0].mxu0
    %122 = vmatprep.mubr.f32.mxu0 0.0
    %123 = vmatmul.mubr.f32.gmra.mrb[0].mxu0 %v29
    %v124 = vpop.f32.mrb[0].mxu0
    %v125 = vadd.f32 %v51, %v124
    %v126 = vpop.f32.mrb[0].mxu0
    %127 = vdwg.mxu0
    %128 = vst [vmem:[%s3] sm:$0xff] %v120
    %129 = vst [vmem:[%s3 + $0x8] sm:$0xff] %v125
    // Predicated region
    $region18: #{qkv_forward.1} parent=1 // pred_check
      _
    $region19: #{qkv_forward.1} parent=1 // pred_check_branch
      %131 = sbr.rel (0) target = $region21
    $region20: #{qkv_forward.1} parent=1 // pred_region
      _
    $region21: #{qkv_forward.1} parent=1 // pred_fallthru
      _
    // Predicated region
    $region22: #{qkv_forward.1} parent=1 // pred_check
      _
    $region23: #{qkv_forward.1} parent=1 // pred_check_branch
      %133 = sbr.rel (0) target = $region25
    $region24: #{qkv_forward.1} parent=1 // pred_region
      _
    $region25: #{qkv_forward.1} parent=1 // pred_fallthru
      _
    %134 = vsyncpa [#allocation3], 1

</llo_original>
